<compile_context>
chip_gen: v7x
topology: tpu7x:2x2x1
jax: 0.10.0
libtpu: 0.0.40
codegen_flags: <defaults>
</compile_context>

<pallas_src>
import functools

import jax
import jax.numpy as jnp
from jax.experimental import pallas as pl
from jax.experimental.pallas import tpu as pltpu

_LANES = 128
_SAMPLES_PER_ROW = _LANES // 2  # 64 samples per 128-lane row (x0/x1 interleaved)


def _quad_logistic_kernel(params_ref, x_ref, o_ref):
    # params_ref lives in SMEM: [a, b, c, d, e, f]
    a = params_ref[0]
    b = params_ref[1]
    c = params_ref[2]
    d = params_ref[3]
    e = params_ref[4]
    f = params_ref[5]

    # x_ref block is (R, 128); row-major (N, 2) means lane 2k holds x0 of a
    # sample and lane 2k+1 holds x1 of the same sample.
    xi = x_ref[...]

    # Rotate lanes left by one (shift = 127 == -1 mod 128): at every even lane
    # `other` now holds x1 of the same sample.  Odd lanes become garbage and
    # are discarded by the wrapper's strided slice.  The rotate runs on the
    # XLU, which has plenty of slack in this HBM-bandwidth-bound kernel.
    other = pltpu.roll(xi, _LANES - 1, 1)

    # Horner-factored quadratic: a*x0^2 + b*x0*x1 + c*x1^2 + d*x0 + e*x1 + f
    # (valid at even lanes; odd lanes hold don't-care values).
    z = xi * (a * xi + b * other + d) + other * (c * other + e) + f

    # Sigmoid as a single EUP tanh: sigmoid(z) = 0.5 * tanh(z/2) + 0.5
    o_ref[...] = 0.5 * jnp.tanh(0.5 * z) + 0.5


def _round_up(v, m):
    return ((v + m - 1) // m) * m


@functools.partial(jax.jit, static_argnames=("block_rows_max",))
def quad_logistic_forward(x, params, *, block_rows_max=2048):
    """x: (N, 2) float, params: (6,) float -> (N, 1) float32."""
    n = x.shape[0]
    if n == 0:  # static shape -> plain Python guard is fine under jit
        return jnp.zeros((0, 1), dtype=jnp.float32)

    x = x.astype(jnp.float32)
    params = params.astype(jnp.float32)

    # Row-major (N, 2) flattens to [x0_0, x1_0, x0_1, x1_1, ...]; a free
    # contiguous reshape to (rows, 128) keeps x0/x1 interleaved along lanes,
    # so the kernel reads the raw buffer directly (no transpose/pack pass).
    rows = pl.cdiv(n, _SAMPLES_PER_ROW)
    rows8 = _round_up(rows, 8)

    block_rows = min(block_rows_max, rows8)
    # Keep >=2 parallel grid steps when there is enough work so both
    # TensorCores of a v7x chip can be used (harmless on v5e/v6e).
    if rows8 >= 16:
        block_rows = min(block_rows, _round_up(rows8 // 2, 8))

    rows_padded = pl.cdiv(rows, block_rows) * block_rows
    n_padded = rows_padded * _SAMPLES_PER_ROW

    if n_padded != n:
        x = jnp.pad(x, ((0, n_padded - n), (0, 0)))
    x_rows = x.reshape(rows_padded, _LANES)

    grid = (rows_padded // block_rows,)

    out = pl.pallas_call(
        _quad_logistic_kernel,
        out_shape=jax.ShapeDtypeStruct((rows_padded, _LANES), jnp.float32),
        grid=grid,
        in_specs=[
            # params: whole (6,) array in SMEM, no tiling.
            pl.BlockSpec(memory_space=pltpu.MemorySpace.SMEM),
            # interleaved x slab: one lane-dense (block_rows, 128) block/step.
            pl.BlockSpec((block_rows, _LANES), lambda i: (i, 0)),
        ],
        out_specs=pl.BlockSpec((block_rows, _LANES), lambda i: (i, 0)),
        compiler_params=pltpu.CompilerParams(
            dimension_semantics=("parallel",),
            vmem_limit_bytes=32 * 1024 * 1024,
        ),
    )(params, x_rows)

    # Valid results live in even lanes: flat position 2k == sample k.
    out_flat = out.reshape(-1)
    return out_flat[: 2 * n : 2].reshape(n, 1)


def quad_logistic_ref(x, params):
    a, b, c, d, e, f = [params[i] for i in range(6)]
    x0, x1 = x[:, 0], x[:, 1]
    out = a * x0 * x0 + b * x0 * x1 + c * x1 * x1 + d * x0 + e * x1 + f
    return jax.nn.sigmoid(out).reshape(-1, 1)


if __name__ == "__main__":
    key = jax.random.PRNGKey(0)
    k_x, k_p = jax.random.split(key)

    N = 256  # number of samples; each sample has 2 features (x0, x1)
    x = jax.random.normal(k_x, (N, 2), dtype=jnp.float32)
    # Deterministic init of the 6 scalar parameters a..f (torch.randn(1) each).
    params = jax.random.normal(k_p, (6,), dtype=jnp.float32)

    y = quad_logistic_forward(x, params)
    y = jax.block_until_ready(y)

    y_ref = quad_logistic_ref(x, params)
    assert y.shape == (N, 1)
    assert jnp.allclose(y, y_ref, atol=1e-5, rtol=1e-5)

    print("KERNEL_OK")
</pallas_src>

<mosaic_0001>
module attributes {stable_mosaic.version = 11 : i64} {
  func.func @_quad_logistic_kernel(%arg0: i32, %arg1: memref<6xf32, #tpu.memory_space<smem>>, %arg2: memref<8x128xf32, #tpu.memory_space<vmem>>, %arg3: memref<8x128xf32, #tpu.memory_space<vmem>>) attributes {dimension_semantics = [#tpu.dimension_semantics<parallel>], iteration_bounds = array<i64: 1>, scalar_prefetch = 0 : i64, scratch_operands = 0 : i64, tpu.core_type = #tpu.core_type<tc>, window_params = [{transform_indices = @transform_0, window_bounds = array<i64: 6>}, {transform_indices = @transform_1, window_bounds = array<i64: 8, 128>}, {transform_indices = @transform_2, window_bounds = array<i64: 8, 128>}]} {
    %c0 = arith.constant 0 : index
    %0 = memref.load %arg1[%c0] : memref<6xf32, #tpu.memory_space<smem>>
    %c1 = arith.constant 1 : index
    %1 = memref.load %arg1[%c1] : memref<6xf32, #tpu.memory_space<smem>>
    %c2 = arith.constant 2 : index
    %2 = memref.load %arg1[%c2] : memref<6xf32, #tpu.memory_space<smem>>
    %c3 = arith.constant 3 : index
    %3 = memref.load %arg1[%c3] : memref<6xf32, #tpu.memory_space<smem>>
    %c4 = arith.constant 4 : index
    %4 = memref.load %arg1[%c4] : memref<6xf32, #tpu.memory_space<smem>>
    %c5 = arith.constant 5 : index
    %5 = memref.load %arg1[%c5] : memref<6xf32, #tpu.memory_space<smem>>
    %c0_0 = arith.constant 0 : index
    %c0_1 = arith.constant 0 : index
    %6 = vector.load %arg2[%c0_0, %c0_1] : memref<8x128xf32, #tpu.memory_space<vmem>>, vector<8x128xf32>
    %c127_i32 = arith.constant 127 : i32
    %7 = tpu.dynamic_rotate %6 by %c127_i32 dim 1 : vector<8x128xf32>, i32 -> vector<8x128xf32>
    %8 = vector.broadcast %0 : f32 to vector<8x128xf32>
    %9 = arith.mulf %8, %6 : vector<8x128xf32>
    %10 = vector.broadcast %1 : f32 to vector<8x128xf32>
    %11 = arith.mulf %10, %7 : vector<8x128xf32>
    %12 = arith.addf %9, %11 : vector<8x128xf32>
    %13 = vector.broadcast %3 : f32 to vector<8x128xf32>
    %14 = arith.addf %12, %13 : vector<8x128xf32>
    %15 = arith.mulf %6, %14 : vector<8x128xf32>
    %16 = vector.broadcast %2 : f32 to vector<8x128xf32>
    %17 = arith.mulf %16, %7 : vector<8x128xf32>
    %18 = vector.broadcast %4 : f32 to vector<8x128xf32>
    %19 = arith.addf %17, %18 : vector<8x128xf32>
    %20 = arith.mulf %7, %19 : vector<8x128xf32>
    %21 = arith.addf %15, %20 : vector<8x128xf32>
    %22 = vector.broadcast %5 : f32 to vector<8x128xf32>
    %23 = arith.addf %21, %22 : vector<8x128xf32>
    %cst = arith.constant 5.000000e-01 : f32
    %24 = vector.broadcast %cst : f32 to vector<8x128xf32>
    %25 = arith.mulf %24, %23 : vector<8x128xf32>
    %26 = math.tanh %25 : vector<8x128xf32>
    %cst_2 = arith.constant 5.000000e-01 : f32
    %27 = vector.broadcast %cst_2 : f32 to vector<8x128xf32>
    %28 = arith.mulf %27, %26 : vector<8x128xf32>
    %cst_3 = arith.constant 5.000000e-01 : f32
    %29 = vector.broadcast %cst_3 : f32 to vector<8x128xf32>
    %30 = arith.addf %28, %29 : vector<8x128xf32>
    %c0_4 = arith.constant 0 : index
    %c0_5 = arith.constant 0 : index
    %31 = vector.load %arg3[%c0_4, %c0_5] : memref<8x128xf32, #tpu.memory_space<vmem>>, vector<8x128xf32>
    tpu.vector_store %arg3[%c0_4, %c0_5], %30 {strides = array<i32>} : memref<8x128xf32, #tpu.memory_space<vmem>>, vector<8x128xf32>,
    return
  }
  func.func @transform_0(%arg0: i32) -> i32 {
    %c0_i32 = arith.constant 0 : i32
    %c0_i32_0 = arith.constant 0 : i32
    return %c0_i32 : i32
  }
  func.func @transform_1(%arg0: i32) -> (i32, i32) {
    %c0_i32 = arith.constant 0 : i32
    %c0_i32_0 = arith.constant 0 : i32
    return %arg0, %c0_i32 : i32, i32
  }
  func.func @transform_2(%arg0: i32) -> (i32, i32) {
    %c0_i32 = arith.constant 0 : i32
    %c0_i32_0 = arith.constant 0 : i32
    return %arg0, %c0_i32 : i32, i32
  }
}

</mosaic_0001>

<llo_original>
// kernel: quad_logistic_forward.1
$region0: #{quad_logistic_forward.1}
  #allocation0 [shape = 'u32[]', space=smem, size = 0x4, offset = 0x4, fixed_abs, tag = 'smem constant byte address 0x4 - core index']
  #allocation1 [shape = 'u32[144,128]{1,0:T(1,128)}', space=vmem, size = 0x12000, scoped, tag = 'internal scratch']
  %s0 = inlined_call_operand.vmem [shape: f32[6], index: 0, kind: input, shape index: {}]
  %s1 = inlined_call_operand.vmem [shape: f32[8,128], index: 1, kind: input, shape index: {}]
  %s2 = inlined_call_operand.vmem [shape: f32[8,128], index: 2, kind: output, shape index: {}]
  %s3 = sld [smem:[#allocation0]]
  $region22: #{quad_logistic_forward.1} parent=0
    _
  %s5 = ssub.s32 1, %s3
  %s6 = scalar_select 0, %s5, %s3
  $region1: #{quad_logistic_forward.1} parent=0
    #allocation2 [shape = 'u8[512]{0}', space=smem, size = 0x200, scoped, tag = 'input window, operand 0, single buffered']
    #allocation3 [shape = 's32[1]{0}', space=sflag, size = 0x4, scoped, tag = 'scoped memory for quad_logistic_forward.1']
    %7 = vsyncpa [#allocation3], 0
    // Predicated region
    $region2: #{quad_logistic_forward.1} parent=1 // pred_check
      _
    $region3: #{quad_logistic_forward.1} parent=1 // pred_check_branch
      %9 = sbr.rel (0) target = $region5
    $region4: #{quad_logistic_forward.1} parent=1 // pred_region
      %s11 = ssub.s32 16, 16
      %12 = vsyncadd [#allocation3], %s11
      %s14 = sshll.u32 %s0, 4
      %s15 = int_to_ptr.vmem [resolvable:$true] %s14
      %17 = dma.vmem_to_smem %s15, 16, [#allocation2], [#allocation3]
    $region5: #{quad_logistic_forward.1} parent=1 // pred_fallthru
      _
    // Predicated region
    $region6: #{quad_logistic_forward.1} parent=1 // pred_check
      _
    $region7: #{quad_logistic_forward.1} parent=1 // pred_check_branch
      %19 = sbr.rel (0) target = $region9
    $region8: #{quad_logistic_forward.1} parent=1 // pred_region
      _
    $region9: #{quad_logistic_forward.1} parent=1 // pred_fallthru
      _
    // Predicated region
    $region10: #{quad_logistic_forward.1} parent=1 // pred_check
      _
    $region11: #{quad_logistic_forward.1} parent=1 // pred_check_branch
      %21 = sbr.rel (0) target = $region13
    $region12: #{quad_logistic_forward.1} parent=1 // pred_region
      %22 = dma.done [#allocation3], 16
    $region13: #{quad_logistic_forward.1} parent=1 // pred_fallthru
      _
    %23 = sfence
    %s24 = sld [smem:[#allocation2]]
    %s25 = sld [smem:[#allocation2 + $0x1]]
    %s26 = sld [smem:[#allocation2 + $0x2]]
    %s27 = sld [smem:[#allocation2 + $0x3]]
    %s28 = sld [smem:[#allocation2 + $0x4]]
    %s29 = sld [smem:[#allocation2 + $0x5]]
    %v30 = vld [vmem:[%s1] sm:$0xff]
    %31 = vrot.lane.b32.xlu0 %v30, 127
    %v32 = vpop.permute.xlu0 %31
    %v33 = vstv %s24
    %v34 = vmul.f32 %v33, %v30
    %v35 = vstv %s25
    %v36 = vmul.f32 %v35, %v32
    %v37 = vadd.f32 %v34, %v36
    %v38 = vstv %s27
    %v39 = vadd.f32 %v37, %v38
    %v40 = vmul.f32 %v30, %v39
    %v41 = vstv %s26
    %v42 = vmul.f32 %v41, %v32
    %v43 = vstv %s28
    %v44 = vadd.f32 %v42, %v43
    %v45 = vmul.f32 %v32, %v44
    %v46 = vadd.f32 %v40, %v45
    %v47 = vstv %s29
    %v48 = vadd.f32 %v46, %v47
    %v49 = vmul.f32 %v48, 0.5
    %v50 = vtanh.pop %v49
    %v51 = vmul.f32 %v50, 0.5
    %v52 = vadd.f32 %v51, 0.5
    %53 = vst [vmem:[%s2] sm:$0xff] %v52
    // Predicated region
    $region14: #{quad_logistic_forward.1} parent=1 // pred_check
      _
    $region15: #{quad_logistic_forward.1} parent=1 // pred_check_branch
      %55 = sbr.rel (0) target = $region17
    $region16: #{quad_logistic_forward.1} parent=1 // pred_region
      _
    $region17: #{quad_logistic_forward.1} parent=1 // pred_fallthru
      _
    // Predicated region
    $region18: #{quad_logistic_forward.1} parent=1 // pred_check
      _
    $region19: #{quad_logistic_forward.1} parent=1 // pred_check_branch
      %57 = sbr.rel (0) target = $region21
    $region20: #{quad_logistic_forward.1} parent=1 // pred_region
      _
    $region21: #{quad_logistic_forward.1} parent=1 // pred_fallthru
      _
    %58 = vsyncpa [#allocation3], 1

</llo_original>
